<compile_context>
chip_gen: v7x
topology: tpu7x:2x2x1
jax: 0.10.0
libtpu: 0.0.40
codegen_flags: <defaults>
</compile_context>

<pallas_src>
import math

import jax
import jax.numpy as jnp
from jax.experimental import pallas as pl
from jax.experimental.pallas import tpu as pltpu


def cross_attn_kernel(x_ref, aux_ref, o_ref):
    # x_ref   : (B, C, HW)  full slab, native NCHW-flattened layout
    # aux_ref : (B, C, 3)   per channel: [kq, Wo·v, bo]
    # o_ref   : (B, C, HW)
    x = x_ref[...]                       # (B, C, HW)
    aux = aux_ref[...]                   # (B, C, 3)
    kq = aux[:, :, 0:1]                  # (B, C, 1)
    ov = aux[:, :, 1:2]                  # (B, C, 1)
    bo = aux[:, :, 2:3]                  # (B, C, 1)

    # attention logits, lane-major: scores[b, p] = sum_c x[b, c, p] * kq[b, c]
    # (At C>=256 this should become an MXU matvec; at C=8 the sublane reduce
    #  is negligible.)
    scores = jnp.sum(x * kq, axis=1, keepdims=True)            # (B, 1, HW)

    # softmax over the spatial (lane) axis, per batch
    m = jnp.max(scores, axis=-1, keepdims=True)                 # (B, 1, 1)
    e = jnp.exp(scores - m)                                      # (B, 1, HW)
    denom = jnp.sum(e, axis=-1, keepdims=True)                   # (B, 1, 1)
    attn = e / denom                                             # (B, 1, HW)

    # out[b, c, p] = attn[b, p] * (Wo v)[b, c] + bo[c]  (rank-1 outer + bias)
    o_ref[...] = (ov * attn + bo).astype(o_ref.dtype)            # (B, C, HW)


def cross_attention_block(x_nchw, text_feat, params):
    """x_nchw: (B, C, H, W) float32; text_feat: (B, text_dim) float32."""
    b, c, h, w = x_nchw.shape
    d = text_feat.shape[1]
    hw = h * w
    scaling = float(c) ** (-0.5)

    # Native layout: NCHW viewed as (B, C, HW), no transposes.
    x_flat = x_nchw.reshape(b, c, hw)

    # --- Fold the whole text path into one dot -------------------------------
    #   kq[b] = scaling * Wq^T (Wk text[b] + bk)   (bq·k dropped: softmax shift)
    #   ov[b] = Wo (Wv text[b] + bv)
    w_kq = scaling * (params["wk"].T @ params["wq"])             # (D, C)
    b_kq = scaling * (params["bk"] @ params["wq"])               # (C,)
    w_ov = params["wv"].T @ params["wo"].T                       # (D, C)
    b_ov = params["bv"] @ params["wo"].T                         # (C,)

    # Interleave columns per channel as [kq, ov, bo] so one matmul + reshape
    # yields the packed (B, C, 3) aux array directly.
    w_ext = jnp.stack([w_kq, w_ov, jnp.zeros_like(w_ov)], axis=-1).reshape(d, 3 * c)
    b_ext = jnp.stack([b_kq, b_ov, params["bo"]], axis=-1).reshape(3 * c)
    aux = (text_feat @ w_ext + b_ext).reshape(b, c, 3)           # (B, C, 3)
    # -------------------------------------------------------------------------

    out = pl.pallas_call(
        cross_attn_kernel,
        out_shape=jax.ShapeDtypeStruct((b, c, hw), jnp.float32),
        grid=(1,),  # single step: whole slab fits trivially in VMEM
        in_specs=[
            pl.BlockSpec((b, c, hw), lambda i: (0, 0, 0)),       # x slab
            pl.BlockSpec((b, c, 3), lambda i: (0, 0, 0)),        # packed kq/ov/bo
        ],
        out_specs=pl.BlockSpec((b, c, hw), lambda i: (0, 0, 0)),
        compiler_params=pltpu.CompilerParams(dimension_semantics=("arbitrary",)),
    )(x_flat, aux)

    # NCHW output is just a reshape of the (B, C, HW) result.
    return out.reshape(b, c, h, w)


def reference(x, text_feat, params):
    """Pure-JAX replica of the PyTorch forward (for verification)."""
    b, c, h, w = x.shape
    scaling = float(c) ** (-0.5)
    q = jnp.einsum("oi,bihw->bohw", params["wq"], x) + params["bq"][None, :, None, None]
    q = q.reshape(b, c, -1)                                # (B, C, HW)
    k = text_feat @ params["wk"].T + params["bk"]          # (B, C)
    v = text_feat @ params["wv"].T + params["bv"]          # (B, C)
    attn = jnp.einsum("bcp,bc->bp", q, k) * scaling        # (B, HW)
    attn = jax.nn.softmax(attn, axis=1)
    out = jnp.einsum("bc,bp->bcp", v, attn).reshape(b, c, h, w)
    out = jnp.einsum("oi,bihw->bohw", params["wo"], out) + params["bo"][None, :, None, None]
    return out


def init_params(key, channels, text_dim):
    ks = jax.random.split(key, 8)
    sc = 1.0 / math.sqrt(channels)
    st = 1.0 / math.sqrt(text_dim)
    u = lambda k, shape, s: jax.random.uniform(k, shape, jnp.float32, -s, s)
    return {
        "wq": u(ks[0], (channels, channels), sc),   # Conv2d(C,C,1) weight (out,in)
        "bq": u(ks[1], (channels,), sc),
        "wk": u(ks[2], (channels, text_dim), st),   # Linear(text_dim,C) weight
        "bk": u(ks[3], (channels,), st),
        "wv": u(ks[4], (channels, text_dim), st),
        "bv": u(ks[5], (channels,), st),
        "wo": u(ks[6], (channels, channels), sc),   # Conv2d(C,C,1) weight
        "bo": u(ks[7], (channels,), sc),
    }


if __name__ == "__main__":
    B, C, H, W, D = 2, 8, 16, 16, 32

    key = jax.random.PRNGKey(0)
    kx, kt, kp = jax.random.split(key, 3)
    x = jax.random.normal(kx, (B, C, H, W), jnp.float32)
    text_feat = jax.random.normal(kt, (B, D), jnp.float32)
    params = init_params(kp, C, D)

    y = cross_attention_block(x, text_feat, params)
    y = jax.block_until_ready(y)

    y_ref = reference(x, text_feat, params)
    assert y.shape == (B, C, H, W)
    assert jnp.allclose(y, y_ref, atol=1e-5, rtol=1e-5), (
        float(jnp.max(jnp.abs(y - y_ref)))
    )
    print("KERNEL_OK")
</pallas_src>

<mosaic_0001>
module attributes {stable_mosaic.version = 11 : i64} {
  func.func @cross_attn_kernel(%arg0: i32, %arg1: memref<2x8x256xf32, #tpu.memory_space<vmem>>, %arg2: memref<2x8x3xf32, #tpu.memory_space<vmem>>, %arg3: memref<2x8x256xf32, #tpu.memory_space<vmem>>) attributes {dimension_semantics = [#tpu.dimension_semantics<arbitrary>], iteration_bounds = array<i64: 1>, scalar_prefetch = 0 : i64, scratch_operands = 0 : i64, tpu.core_type = #tpu.core_type<tc>, window_params = [{pipeline_mode = #tpu.pipeline_mode<synchronous>, transform_indices = @transform_0, window_bounds = array<i64: 2, 8, 256>}, {pipeline_mode = #tpu.pipeline_mode<synchronous>, transform_indices = @transform_1, window_bounds = array<i64: 2, 8, 3>}, {pipeline_mode = #tpu.pipeline_mode<synchronous>, transform_indices = @transform_2, window_bounds = array<i64: 2, 8, 256>}]} {
    %c0 = arith.constant 0 : index
    %c0_0 = arith.constant 0 : index
    %c0_1 = arith.constant 0 : index
    %0 = vector.load %arg1[%c0, %c0_0, %c0_1] : memref<2x8x256xf32, #tpu.memory_space<vmem>>, vector<2x8x256xf32>
    %c0_2 = arith.constant 0 : index
    %c0_3 = arith.constant 0 : index
    %c0_4 = arith.constant 0 : index
    %1 = vector.load %arg2[%c0_2, %c0_3, %c0_4] : memref<2x8x3xf32, #tpu.memory_space<vmem>>, vector<2x8x3xf32>
    %2 = vector.extract_strided_slice %1 {offsets = [0, 0, 0], sizes = [2, 8, 1], strides = [1, 1, 1]} : vector<2x8x3xf32> to vector<2x8x1xf32>
    %3 = vector.extract_strided_slice %1 {offsets = [0, 0, 1], sizes = [2, 8, 1], strides = [1, 1, 1]} : vector<2x8x3xf32> to vector<2x8x1xf32>
    %4 = vector.extract_strided_slice %1 {offsets = [0, 0, 2], sizes = [2, 8, 1], strides = [1, 1, 1]} : vector<2x8x3xf32> to vector<2x8x1xf32>
    %5 = vector.broadcast %2 : vector<2x8x1xf32> to vector<2x8x256xf32>
    %6 = arith.mulf %0, %5 : vector<2x8x256xf32>
    %cst = arith.constant dense<0.000000e+00> : vector<2x256xf32>
    %7 = vector.multi_reduction <add>, %6, %cst [1] : vector<2x8x256xf32> to vector<2x256xf32>
    %8 = vector.shape_cast %7 : vector<2x256xf32> to vector<2x1x256xf32>
    %cst_5 = arith.constant dense<0xFF800000> : vector<2x1xf32>
    %9 = vector.multi_reduction <maximumf>, %8, %cst_5 [2] : vector<2x1x256xf32> to vector<2x1xf32>
    %10 = vector.shape_cast %9 : vector<2x1xf32> to vector<2x1x1xf32>
    %11 = vector.broadcast %10 : vector<2x1x1xf32> to vector<2x1x256xf32>
    %12 = arith.subf %8, %11 : vector<2x1x256xf32>
    %13 = math.exp %12 : vector<2x1x256xf32>
    %cst_6 = arith.constant dense<0.000000e+00> : vector<2x1xf32>
    %14 = vector.multi_reduction <add>, %13, %cst_6 [2] : vector<2x1x256xf32> to vector<2x1xf32>
    %15 = vector.shape_cast %14 : vector<2x1xf32> to vector<2x1x1xf32>
    %16 = vector.broadcast %15 : vector<2x1x1xf32> to vector<2x1x256xf32>
    %17 = arith.divf %13, %16 : vector<2x1x256xf32>
    %18 = vector.broadcast %3 : vector<2x8x1xf32> to vector<2x8x256xf32>
    %19 = vector.broadcast %17 : vector<2x1x256xf32> to vector<2x8x256xf32>
    %20 = arith.mulf %18, %19 : vector<2x8x256xf32>
    %21 = vector.broadcast %4 : vector<2x8x1xf32> to vector<2x8x256xf32>
    %22 = arith.addf %20, %21 : vector<2x8x256xf32>
    %c0_7 = arith.constant 0 : index
    %c0_8 = arith.constant 0 : index
    %c0_9 = arith.constant 0 : index
    %23 = vector.load %arg3[%c0_7, %c0_8, %c0_9] : memref<2x8x256xf32, #tpu.memory_space<vmem>>, vector<2x8x256xf32>
    tpu.vector_store %arg3[%c0_7, %c0_8, %c0_9], %22 {strides = array<i32>} : memref<2x8x256xf32, #tpu.memory_space<vmem>>, vector<2x8x256xf32>,
    return
  }
  func.func @transform_0(%arg0: i32) -> (i32, i32, i32) {
    %c0_i32 = arith.constant 0 : i32
    %c0_i32_0 = arith.constant 0 : i32
    %c0_i32_1 = arith.constant 0 : i32
    %c0_i32_2 = arith.constant 0 : i32
    return %c0_i32, %c0_i32_0, %c0_i32_1 : i32, i32, i32
  }
  func.func @transform_1(%arg0: i32) -> (i32, i32, i32) {
    %c0_i32 = arith.constant 0 : i32
    %c0_i32_0 = arith.constant 0 : i32
    %c0_i32_1 = arith.constant 0 : i32
    %c0_i32_2 = arith.constant 0 : i32
    return %c0_i32, %c0_i32_0, %c0_i32_1 : i32, i32, i32
  }
  func.func @transform_2(%arg0: i32) -> (i32, i32, i32) {
    %c0_i32 = arith.constant 0 : i32
    %c0_i32_0 = arith.constant 0 : i32
    %c0_i32_1 = arith.constant 0 : i32
    %c0_i32_2 = arith.constant 0 : i32
    return %c0_i32, %c0_i32_0, %c0_i32_1 : i32, i32, i32
  }
}

</mosaic_0001>

<llo_original>
// kernel: tpu_custom_call.1
$region0: #{tpu_custom_call.1}
  #allocation0 [shape = 'u32[]', space=smem, size = 0x4, offset = 0x4, fixed_abs, tag = 'smem constant byte address 0x4 - core index']
  #allocation1 [shape = 'u32[144,128]{1,0:T(1,128)}', space=vmem, size = 0x12000, scoped, tag = 'internal scratch']
  %s0 = inlined_call_operand.hbm [shape: f32[2,8,256], index: 0, kind: input, shape index: {}]
  %s1 = inlined_call_operand.vmem [shape: f32[2,8,3], index: 1, kind: input, shape index: {}]
  %s2 = inlined_call_operand.hbm [shape: f32[2,8,256], index: 2, kind: output, shape index: {}]
  %s3 = sld [smem:[#allocation0]]
  $region22: #{tpu_custom_call.1} parent=0
    _
  %s5 = ssub.s32 1, %s3
  %s6 = scalar_select 0, %s5, %s3
  $region1: #{tpu_custom_call.1} parent=0
    #allocation2 [shape = 'u8[16384]{0}', space=vmem, size = 0x4000, scoped, tag = 'input window, operand 0, single buffered']
    #allocation3 [shape = 's32[1]{0}', space=sflag, size = 0x4, scoped, tag = 'scoped memory for tpu_custom_call.1']
    #allocation4 [shape = 's32[1]{0}', space=sflag, size = 0x4, scoped, tag = 'scoped memory for tpu_custom_call.1']
    #allocation5 [shape = 'u8[16384]{0}', space=vmem, size = 0x4000, scoped, tag = 'output window, operand 0, single buffered']
    %7 = vsyncpa [#allocation3], 0
    %8 = vsyncpa [#allocation4], 0
    // Predicated region
    $region2: #{tpu_custom_call.1} parent=1 // pred_check
      _
    $region3: #{tpu_custom_call.1} parent=1 // pred_check_branch
      %10 = sbr.rel (0) target = $region5
    $region4: #{tpu_custom_call.1} parent=1 // pred_region
      %s12 = ssub.s32 512, 512
      %13 = vsyncadd [#allocation3], %s12
      %s14 = sshll.u32 [#allocation2], 4
      %s15 = int_to_ptr.vmem [resolvable:$true] %s14
      %20 = dma.hbm_to_vmem [thread:$0]  %s0, 512, %s15, [#allocation3], 256, 256, 16
    $region5: #{tpu_custom_call.1} parent=1 // pred_fallthru
      _
    // Predicated region
    $region6: #{tpu_custom_call.1} parent=1 // pred_check
      _
    $region7: #{tpu_custom_call.1} parent=1 // pred_check_branch
      %22 = sbr.rel (0) target = $region9
    $region8: #{tpu_custom_call.1} parent=1 // pred_region
      _
    $region9: #{tpu_custom_call.1} parent=1 // pred_fallthru
      _
    // Predicated region
    $region10: #{tpu_custom_call.1} parent=1 // pred_check
      _
    $region11: #{tpu_custom_call.1} parent=1 // pred_check_branch
      %24 = sbr.rel (0) target = $region13
    $region12: #{tpu_custom_call.1} parent=1 // pred_region
      %25 = dma.done [#allocation3], 512
    $region13: #{tpu_custom_call.1} parent=1 // pred_fallthru
      _
    %v26 = vld [vmem:[#allocation2] sm:$0xff]
    %v27 = vld [vmem:[#allocation2 + $0x8] sm:$0xff]
    %v28 = vld [vmem:[#allocation2 + $0x10] sm:$0xff]
    %v29 = vld [vmem:[#allocation2 + $0x18] sm:$0xff]
    %v30 = vld [vmem:[%s1] sm:$0xff]
    %v31 = vld [vmem:[%s1 + $0x8] sm:$0xff]
    %33 = vset.pattern.permute.xlu0 0
    %34 = vperm.xlu0 %33, %v30
    %v35 = vpop.permute.xlu0 %34
    %38 = vset.pattern.permute.xlu0 0
    %39 = vperm.xlu0 %38, %v31
    %v40 = vpop.permute.xlu0 %39
    %v42 = vmul.f32 %v26, %v35
    %v43 = vmul.f32 %v27, %v35
    %v44 = vmul.f32 %v28, %v40
    %v45 = vmul.f32 %v29, %v40
    %v46 = vrot.slane %v42, 4
    %v47 = vadd.f32 %v42, %v46
    %v48 = vrot.slane %v47, 2
    %v49 = vadd.f32 %v47, %v48
    %v50 = vrot.slane %v49, 1
    %v51 = vadd.f32 %v49, %v50
    %v52 = vrot.slane %v43, 4
    %v53 = vadd.f32 %v43, %v52
    %v54 = vrot.slane %v53, 2
    %v55 = vadd.f32 %v53, %v54
    %v56 = vrot.slane %v55, 1
    %v57 = vadd.f32 %v55, %v56
    %v58 = vrot.slane %v44, 4
    %v59 = vadd.f32 %v44, %v58
    %v60 = vrot.slane %v59, 2
    %v61 = vadd.f32 %v59, %v60
    %v62 = vrot.slane %v61, 1
    %v63 = vadd.f32 %v61, %v62
    %v64 = vrot.slane %v45, 4
    %v65 = vadd.f32 %v45, %v64
    %v66 = vrot.slane %v65, 2
    %v67 = vadd.f32 %v65, %v66
    %v68 = vrot.slane %v67, 1
    %v69 = vadd.f32 %v67, %v68
    %v70 = vmax.f32 %v51, %v57
    %71 = vmax.xlane.f32.xlu0 %v70
    %v72 = vpop.xlane.xlu0 %71
    %v73 = vmax.f32 %v63, %v69
    %74 = vmax.xlane.f32.xlu0 %v73
    %v75 = vpop.xlane.xlu0 %74
    %v76 = vsub.f32 %v51, %v72
    %v77 = vsub.f32 %v57, %v72
    %v78 = vsub.f32 %v63, %v75
    %v79 = vsub.f32 %v69, %v75
    %v80 = vmul.f32 %v76, 1.442695
    %v81 = vpow.pop %v80
    %v82 = vmul.f32 %v77, 1.442695
    %v83 = vpow.pop %v82
    %v84 = vmul.f32 %v78, 1.442695
    %v85 = vpow.pop %v84
    %v86 = vmul.f32 %v79, 1.442695
    %v87 = vpow.pop %v86
    %v88 = vadd.f32 %v81, %v83
    %89 = vadd.xlane.f32.xlu0 %v88
    %v90 = vpop.xlane.xlu0 %89
    %v91 = vadd.f32 %v85, %v87
    %92 = vadd.xlane.f32.xlu0 %v91
    %v93 = vpop.xlane.xlu0 %92
    %v94 = vrcp.pop %v90
    %v95 = vmul.f32 %v81, %v94
    %v96 = vmul.f32 %v83, %v94
    %v97 = vrcp.pop %v93
    %v98 = vmul.f32 %v85, %v97
    %v99 = vmul.f32 %v87, %v97
    %100 = vset.pattern.permute.xlu0 1
    %101 = vperm.xlu0 %100, %v30
    %v102 = vpop.permute.xlu0 %101
    %104 = vset.pattern.permute.xlu0 1
    %105 = vperm.xlu0 %104, %v31
    %v106 = vpop.permute.xlu0 %105
    %v108 = vmul.f32 %v102, %v95
    %v109 = vmul.f32 %v102, %v96
    %v110 = vmul.f32 %v106, %v98
    %v111 = vmul.f32 %v106, %v99
    %112 = vset.pattern.permute.xlu0 2
    %113 = vperm.xlu0 %112, %v30
    %v114 = vpop.permute.xlu0 %113
    %116 = vset.pattern.permute.xlu0 2
    %117 = vperm.xlu0 %116, %v31
    %v118 = vpop.permute.xlu0 %117
    %v120 = vadd.f32 %v108, %v114
    %v121 = vadd.f32 %v109, %v114
    %v122 = vadd.f32 %v110, %v118
    %v123 = vadd.f32 %v111, %v118
    %124 = vst [vmem:[#allocation5] sm:$0xff] %v120
    %125 = vst [vmem:[#allocation5 + $0x8] sm:$0xff] %v121
    %126 = vst [vmem:[#allocation5 + $0x10] sm:$0xff] %v122
    %127 = vst [vmem:[#allocation5 + $0x18] sm:$0xff] %v123
    // Predicated region
    $region14: #{tpu_custom_call.1} parent=1 // pred_check
      _
    $region15: #{tpu_custom_call.1} parent=1 // pred_check_branch
      %129 = sbr.rel (0) target = $region17
    $region16: #{tpu_custom_call.1} parent=1 // pred_region
      %s131 = ssub.s32 512, 512
      %132 = vsyncadd [#allocation4], %s131
      %s133 = sshll.u32 [#allocation5], 4
      %s134 = int_to_ptr.vmem [resolvable:$true] %s133
      %139 = dma.vmem_to_hbm [thread:$0]  %s134, 512, %s2, [#allocation4], 256, 256, 16
    $region17: #{tpu_custom_call.1} parent=1 // pred_fallthru
      _
    // Predicated region
    $region18: #{tpu_custom_call.1} parent=1 // pred_check
      _
    $region19: #{tpu_custom_call.1} parent=1 // pred_check_branch
      %141 = sbr.rel (0) target = $region21
    $region20: #{tpu_custom_call.1} parent=1 // pred_region
      %142 = dma.done [#allocation4], 512
    $region21: #{tpu_custom_call.1} parent=1 // pred_fallthru
      _
    %143 = vsyncpa [#allocation3], 1
    %144 = vsyncpa [#allocation4], 1

</llo_original>
